<compile_context>
chip_gen: v6e
topology: v6e:2x2x1
jax: 0.10.0
libtpu: 0.0.40
codegen_flags: <defaults>
</compile_context>

<pallas_src>
import functools

import jax
import jax.numpy as jnp
from jax.experimental import pallas as pl
from jax.experimental.pallas import tpu as pltpu


_TM_CAP = 512                 # row-tile cap (resident path / f32 tiled path)
_XLA_FALLBACK_WORK = 1 << 21  # M*K*N below this -> plain XLA dot


# ----------------------------------------------------------------------------
# Hardware probing (generation-aware VMEM budgets, TensorCore count).
# ----------------------------------------------------------------------------
def _probe_hw():
    """Best-effort (vmem_bytes_per_core, num_tensorcores)."""
    vmem = None
    cores = None
    try:
        info = pltpu.get_tpu_info()
        for name in ("vmem_capacity_bytes", "vmem_size_bytes", "vmem_bytes"):
            v = getattr(info, name, None)
            if isinstance(v, int) and v > 0:
                vmem = v
                break
        for name in ("num_cores", "core_count", "num_tensorcores",
                     "tensorcore_count"):
            v = getattr(info, name, None)
            if isinstance(v, int) and v > 0:
                cores = v
                break
    except Exception:
        pass
    if vmem is None or cores is None:
        try:
            kind = jax.devices()[0].device_kind.lower()
        except Exception:
            kind = ""
        if vmem is None:
            # v7x: 64 MiB per TC; v4/v5/v6: 128 MiB; unknown: conservative.
            if "v7" in kind:
                vmem = 64 << 20
            elif any(g in kind for g in ("v4", "v5", "v6")):
                vmem = 128 << 20
            else:
                vmem = 64 << 20
        if cores is None:
            cores = 2 if ("v7" in kind or "v4" in kind or "v5p" in kind) else 1
    return vmem, cores


_VMEM_CAP, _NUM_CORES = _probe_hw()
# Resident working-set budget / Mosaic scoped-VMEM limit, leaving headroom for
# Mosaic-internal scratch.  v7x (64 MiB/TC): ~38 / ~41 MiB.  v5e/v6e (128 MiB):
# ~77 / ~82 MiB.
_VMEM_TILE_BUDGET = int(_VMEM_CAP * 0.60)
_VMEM_LIMIT_BYTES = int(_VMEM_CAP * 0.64)


# ----------------------------------------------------------------------------
# Small helpers.
# ----------------------------------------------------------------------------
def _round_up(x: int, m: int) -> int:
    return ((x + m - 1) // m) * m


def _sublane_multiple(itemsize: int) -> int:
    # Native second-minor tile: 8 for 4-byte, 16 for 2-byte, 32 for 1-byte.
    return {4: 8, 2: 16, 1: 32}.get(itemsize, 8)


def _pad2(a: jax.Array, rows: int, cols: int) -> jax.Array:
    pr, pc = rows - a.shape[0], cols - a.shape[1]
    if pr == 0 and pc == 0:
        return a
    return jnp.pad(a, ((0, pr), (0, pc)))


def _pick_tile(dim: int, cands) -> int:
    """Largest tile that doesn't inflate the padded dim much beyond its
    128-aligned size (prefer 256+-wide feeds to the 256x256 MXUs)."""
    base = _round_up(dim, 128)
    for c in cands:  # descending
        padded = _round_up(dim, c)
        if padded == base or padded - dim <= max(dim // 8, 0):
            return c
    return cands[-1]


# ----------------------------------------------------------------------------
# Kernels.
# ----------------------------------------------------------------------------
def _resident_kernel(x_ref, w_ref, o_ref, *, precision):
    """One (tm, k_pad) row tile of inp against a VMEM-resident weight slab."""
    o_ref[...] = jnp.dot(
        x_ref[...], w_ref[...],
        preferred_element_type=jnp.float32,
        precision=precision,
    ).astype(o_ref.dtype)


def _acc_kernel(x_ref, w_ref, o_ref, acc_ref, *, precision):
    """One (tm, tn) output tile, accumulated over the (last) K grid axis."""
    @pl.when(pl.program_id(2) == 0)
    def _():
        acc_ref[...] = jnp.zeros_like(acc_ref)

    acc_ref[...] += jnp.dot(
        x_ref[...], w_ref[...],
        preferred_element_type=jnp.float32,
        precision=precision,
    )

    @pl.when(pl.program_id(2) == pl.num_programs(2) - 1)
    def _():
        o_ref[...] = acc_ref[...].astype(o_ref.dtype)


# ----------------------------------------------------------------------------
# Planning.
# ----------------------------------------------------------------------------
def _choose_resident_plan(m_sub, k_pad, n_pad, itemsize, sublane):
    """Return (tm, n_slabs) for the weight-resident path, or None if the
    weight (even column-sliced) cannot stay resident under the VMEM budget."""
    # Balanced row tiles: as few tiles as possible under the cap, equal sized.
    n_m = max(1, -(-m_sub // _TM_CAP))
    tm0 = _round_up(-(-m_sub // n_m), sublane)

    # Candidate N-slab counts keeping each slab lane-dense (multiple of 128).
    slab_cands = [s for s in (1, 2, 4, 8) if n_pad % (s * 128) == 0] or [1]
    # On dual-TC chips prefer sharding the weight by columns (one slab per
    # core) over duplicating the full weight in each core's VMEM.
    if _NUM_CORES >= 2 and any(s >= _NUM_CORES for s in slab_cands):
        min_slabs = _NUM_CORES
    else:
        min_slabs = 1

    def ws(t, s):
        tn = n_pad // s
        return (k_pad * tn            # weight slab, single-buffered (resident)
                + 2 * t * k_pad       # x row tile, double-buffered
                + 2 * t * tn          # output tile, double-buffered
                ) * itemsize

    def finish(t, s):
        # Dual-core chip, single un-splittable weight slab, single M tile:
        # split rows so both TensorCores get work.
        if (_NUM_CORES >= 2 and s == 1 and _round_up(m_sub, t) == t
                and m_sub >= 2 * sublane):
            t = _round_up(-(-m_sub // 2), sublane)
        return t, s

    # First try to keep the full row tile; only then shrink it.
    for s in slab_cands:
        if s >= min_slabs and ws(tm0, s) <= _VMEM_TILE_BUDGET:
            return finish(tm0, s)
    for s in slab_cands:
        if s < min_slabs:
            continue
        t = tm0
        while t > sublane and ws(t, s) > _VMEM_TILE_BUDGET:
            t = max(sublane, _round_up(t // 2, sublane))
        if ws(t, s) <= _VMEM_TILE_BUDGET:
            return finish(t, s)
    return None


def _resident_weight_spec(k_pad, tn):
    imap = lambda j, i: (0, j)
    try:
        # Constant block index within a slab -> never re-fetched; a single
        # buffer halves the weight's VMEM footprint.
        return pl.BlockSpec((k_pad, tn), imap, pipeline_mode=pl.Buffered(1))
    except Exception:
        return pl.BlockSpec((k_pad, tn), imap)


# ----------------------------------------------------------------------------
# Matmul paths.
# ----------------------------------------------------------------------------
def _resident_matmul(inp, weight, plan, M, N, k_pad, n_pad, out_dtype,
                     precision, cost):
    tm, n_slabs = plan
    m_pad = _round_up(M, tm)
    tn = n_pad // n_slabs

    x_p = _pad2(inp, m_pad, k_pad)
    w_p = _pad2(weight, k_pad, n_pad)

    kernel = functools.partial(_resident_kernel, precision=precision)
    out = pl.pallas_call(
        kernel,
        out_shape=jax.ShapeDtypeStruct((m_pad, n_pad), out_dtype),
        grid_spec=pltpu.PrefetchScalarGridSpec(
            num_scalar_prefetch=0,
            # N-slab axis outer (slow): each weight slab is DMA'd exactly
            # once; on dual-TC chips the "parallel" slab axis shards the
            # weight across cores instead of duplicating it.
            grid=(n_slabs, m_pad // tm),
            in_specs=[
                pl.BlockSpec((tm, k_pad), lambda j, i: (i, 0)),
                _resident_weight_spec(k_pad, tn),
            ],
            out_specs=pl.BlockSpec((tm, tn), lambda j, i: (i, j)),
        ),
        compiler_params=pltpu.CompilerParams(
            dimension_semantics=("parallel", "parallel"),
            vmem_limit_bytes=_VMEM_LIMIT_BYTES,
        ),
        cost_estimate=cost,
    )(x_p, w_p)
    return out[:M, :N]


def _tiled_matmul(inp, weight, M, K, N, out_dtype, itemsize, sublane,
                  precision, cost):
    # Narrow dtypes on big-VMEM (v5e/v6e) chips can afford 1024-wide output
    # tiles (higher arithmetic intensity); keep 512 elsewhere (fits 64 MiB).
    big_narrow = itemsize <= 2 and _VMEM_CAP >= (96 << 20)
    tm_cap = 1024 if big_narrow else _TM_CAP

    m_sub = _round_up(M, sublane)
    n_m = max(1, -(-m_sub // tm_cap))
    tm = _round_up(-(-m_sub // n_m), sublane)      # balanced row tiles
    m_pad = _round_up(M, tm)

    tk = _pick_tile(K, (2048, 1024, 512, 256, 128))
    tn = _pick_tile(N, (1024, 512, 256, 128) if big_narrow else (512, 256, 128))
    k_pad = _round_up(K, tk)
    n_pad = _round_up(N, tn)

    x_p = _pad2(inp, m_pad, k_pad)
    w_p = _pad2(weight, k_pad, n_pad)

    kernel = functools.partial(_acc_kernel, precision=precision)
    out = pl.pallas_call(
        kernel,
        out_shape=jax.ShapeDtypeStruct((m_pad, n_pad), out_dtype),
        grid_spec=pltpu.PrefetchScalarGridSpec(
            num_scalar_prefetch=0,
            grid=(m_pad // tm, n_pad // tn, k_pad // tk),
            in_specs=[
                pl.BlockSpec((tm, tk), lambda i, j, k: (i, k)),
                pl.BlockSpec((tk, tn), lambda i, j, k: (k, j)),
            ],
            out_specs=pl.BlockSpec((tm, tn), lambda i, j, k: (i, j)),
            scratch_shapes=[pltpu.VMEM((tm, tn), jnp.float32)],
        ),
        compiler_params=pltpu.CompilerParams(
            dimension_semantics=("parallel", "parallel", "arbitrary"),
            vmem_limit_bytes=_VMEM_LIMIT_BYTES,
        ),
        cost_estimate=cost,
    )(x_p, w_p)
    return out[:M, :N]


# ----------------------------------------------------------------------------
# Public entry point (== GrowableLinear.forward).
# ----------------------------------------------------------------------------
def growable_linear_forward(
    inp: jax.Array,
    weight: jax.Array,
    *,
    precision=None,                 # pass lax.Precision.HIGHEST for full-f32
    allow_xla_fallback: bool = True,
    force_tiled: bool = False,
) -> jax.Array:
    """Pallas equivalent of GrowableLinear.forward: inp @ weight."""
    M, K = inp.shape
    K2, N = weight.shape
    if K != K2:
        raise ValueError(f"inner dims must match, got {K} and {K2}")
    out_dtype = jnp.result_type(inp.dtype, weight.dtype)

    # Tiny layers: pad + dispatch + slice dominate; let XLA fuse the dot.
    if allow_xla_fallback and M * K * N <= _XLA_FALLBACK_WORK:
        return jnp.dot(inp, weight, precision=precision).astype(out_dtype)

    itemsize = max(jnp.dtype(inp.dtype).itemsize,
                   jnp.dtype(weight.dtype).itemsize)
    sublane = _sublane_multiple(itemsize)
    k_pad = _round_up(K, 128)
    n_pad = _round_up(N, 128)

    cost = pl.CostEstimate(
        flops=2 * M * N * K,
        transcendentals=0,
        bytes_accessed=itemsize * (M * K + K * N + M * N),
    )

    if not force_tiled:
        plan = _choose_resident_plan(_round_up(M, sublane), k_pad, n_pad,
                                     itemsize, sublane)
        if plan is not None:
            try:
                return _resident_matmul(inp, weight, plan, M, N, k_pad, n_pad,
                                        out_dtype, precision, cost)
            except Exception:
                pass  # fall through to the always-valid tiled path

    return _tiled_matmul(inp, weight, M, K, N, out_dtype, itemsize, sublane,
                         precision, cost)


def orthogonal_init(key, inf: int, outf: int, dtype=jnp.float32) -> jax.Array:
    """Deterministic stand-in for torch.nn.init.orthogonal_ on (inf, outf)."""
    a = jax.random.normal(key, (max(inf, outf), min(inf, outf)), jnp.float32)
    q, r = jnp.linalg.qr(a)
    q = q * jnp.sign(jnp.diagonal(r))[None, :]
    if inf < outf:
        q = q.T
    return q[:inf, :outf].astype(dtype)


if __name__ == "__main__":
    key = jax.random.PRNGKey(0)
    k_w, k_x, k_w2, k_x2 = jax.random.split(key, 4)

    # Non-tile-aligned shapes (GrowableLinear grows dims one at a time) to
    # exercise padding; force the Pallas paths past the XLA-fallback gate.
    batch, inf, outf = 48, 160, 96
    weight = orthogonal_init(k_w, inf, outf)          # GrowableLinear.weight
    x = jax.random.normal(k_x, (batch, inf), jnp.float32)

    ref = x @ weight

    # 1) Weight-resident Pallas path.
    out = jax.block_until_ready(
        growable_linear_forward(x, weight, allow_xla_fallback=False))
    assert out.shape == (batch, outf)
    # Loose-ish tolerance: the default-precision MXU dot uses bf16 passes.
    assert jnp.allclose(out, ref, atol=2e-2, rtol=2e-2), "resident path mismatch"

    # 2) General K-accumulating tiled path (forced, to exercise compilation).
    out_t = jax.block_until_ready(
        growable_linear_forward(x, weight, allow_xla_fallback=False,
                                force_tiled=True))
    assert jnp.allclose(out_t, ref, atol=2e-2, rtol=2e-2), "tiled path mismatch"

    # 3) Tiny layer: XLA fallback path.
    b2, inf2, outf2 = 8, 32, 32
    w2 = orthogonal_init(k_w2, inf2, outf2)
    x2 = jax.random.normal(k_x2, (b2, inf2), jnp.float32)
    out2 = jax.block_until_ready(growable_linear_forward(x2, w2))
    assert jnp.allclose(out2, x2 @ w2, atol=1e-5, rtol=1e-5), "fallback mismatch"

    # TODO(synk): add_feature()/no_new() are host-side parameter surgery
    # (resizing the weight), not forward-pass ops; no kernel equivalent.
    print("KERNEL_OK")
</pallas_src>

<mosaic_0001>
module attributes {stable_mosaic.version = 11 : i64} {
  func.func @_resident_kernel(%arg0: i32, %arg1: i32, %arg2: memref<48x256xf32, #tpu.memory_space<vmem>>, %arg3: memref<256x128xf32, #tpu.memory_space<vmem>>, %arg4: memref<48x128xf32, #tpu.memory_space<vmem>>) attributes {dimension_semantics = [#tpu.dimension_semantics<parallel>, #tpu.dimension_semantics<parallel>], iteration_bounds = array<i64: 1, 1>, scalar_prefetch = 0 : i64, scratch_operands = 0 : i64, tpu.core_type = #tpu.core_type<tc>, window_params = [{transform_indices = @transform_0, window_bounds = array<i64: 48, 256>}, {pipeline_mode = #tpu.pipeline_mode<synchronous>, transform_indices = @transform_1, window_bounds = array<i64: 256, 128>}, {transform_indices = @transform_2, window_bounds = array<i64: 48, 128>}]} {
    %c0 = arith.constant 0 : index
    %c0_0 = arith.constant 0 : index
    %0 = vector.load %arg2[%c0, %c0_0] : memref<48x256xf32, #tpu.memory_space<vmem>>, vector<48x256xf32>
    %c0_1 = arith.constant 0 : index
    %c0_2 = arith.constant 0 : index
    %1 = vector.load %arg3[%c0_1, %c0_2] : memref<256x128xf32, #tpu.memory_space<vmem>>, vector<256x128xf32>
    %cst = arith.constant dense<0.000000e+00> : vector<48x128xf32>
    %2 = tpu.matmul %0, %1, %cst {dimension_numbers = #tpu.dot_dimension_numbers<[1], [0], [0], [1], [0, 0, 1, 1], [], []>} : vector<48x256xf32>, vector<256x128xf32>, vector<48x128xf32> -> vector<48x128xf32>
    %c0_3 = arith.constant 0 : index
    %c0_4 = arith.constant 0 : index
    %3 = vector.load %arg4[%c0_3, %c0_4] : memref<48x128xf32, #tpu.memory_space<vmem>>, vector<48x128xf32>
    tpu.vector_store %arg4[%c0_3, %c0_4], %2 {strides = array<i32>} : memref<48x128xf32, #tpu.memory_space<vmem>>, vector<48x128xf32>,
    return
  }
  func.func @transform_0(%arg0: i32, %arg1: i32) -> (i32, i32) {
    %c0_i32 = arith.constant 0 : i32
    %c0_i32_0 = arith.constant 0 : i32
    return %arg1, %c0_i32 : i32, i32
  }
  func.func @transform_1(%arg0: i32, %arg1: i32) -> (i32, i32) {
    %c0_i32 = arith.constant 0 : i32
    %c0_i32_0 = arith.constant 0 : i32
    return %c0_i32, %arg0 : i32, i32
  }
  func.func @transform_2(%arg0: i32, %arg1: i32) -> (i32, i32) {
    %c0_i32 = arith.constant 0 : i32
    return %arg1, %arg0 : i32, i32
  }
}

module attributes {stable_mosaic.version = 11 : i64} {
  func.func @_acc_kernel(%arg0: i32, %arg1: i32, %arg2: i32, %arg3: memref<48x256xf32, #tpu.memory_space<vmem>>, %arg4: memref<256x128xf32, #tpu.memory_space<vmem>>, %arg5: memref<48x128xf32, #tpu.memory_space<vmem>>, %arg6: memref<48x128xf32, #tpu.memory_space<vmem>>) attributes {dimension_semantics = [#tpu.dimension_semantics<parallel>, #tpu.dimension_semantics<parallel>, #tpu.dimension_semantics<arbitrary>], iteration_bounds = array<i64: 1, 1, 1>, scalar_prefetch = 0 : i64, scratch_operands = 1 : i64, tpu.core_type = #tpu.core_type<tc>, window_params = [{transform_indices = @transform_0, window_bounds = array<i64: 48, 256>}, {transform_indices = @transform_1, window_bounds = array<i64: 256, 128>}, {transform_indices = @transform_2, window_bounds = array<i64: 48, 128>}]} {
    %c0_i32 = arith.constant 0 : i32
    %0 = arith.cmpi eq, %arg2, %c0_i32 : i32
    %1 = arith.extui %0 : i1 to i32
    %c0_i32_0 = arith.constant 0 : i32
    %2 = arith.cmpi ne, %1, %c0_i32_0 : i32
    scf.if %2 {
      %cst_10 = arith.constant 0.000000e+00 : f32
      %12 = vector.broadcast %cst_10 : f32 to vector<48x128xf32>
      %c0_11 = arith.constant 0 : index
      %c0_12 = arith.constant 0 : index
      %13 = vector.load %arg6[%c0_11, %c0_12] : memref<48x128xf32, #tpu.memory_space<vmem>>, vector<48x128xf32>
      tpu.vector_store %arg6[%c0_11, %c0_12], %12 {strides = array<i32>} : memref<48x128xf32, #tpu.memory_space<vmem>>, vector<48x128xf32>,
    } else {
    }
    %c0 = arith.constant 0 : index
    %c0_1 = arith.constant 0 : index
    %3 = vector.load %arg6[%c0, %c0_1] : memref<48x128xf32, #tpu.memory_space<vmem>>, vector<48x128xf32>
    %c0_2 = arith.constant 0 : index
    %c0_3 = arith.constant 0 : index
    %4 = vector.load %arg3[%c0_2, %c0_3] : memref<48x256xf32, #tpu.memory_space<vmem>>, vector<48x256xf32>
    %c0_4 = arith.constant 0 : index
    %c0_5 = arith.constant 0 : index
    %5 = vector.load %arg4[%c0_4, %c0_5] : memref<256x128xf32, #tpu.memory_space<vmem>>, vector<256x128xf32>
    %cst = arith.constant dense<0.000000e+00> : vector<48x128xf32>
    %6 = tpu.matmul %4, %5, %cst {dimension_numbers = #tpu.dot_dimension_numbers<[1], [0], [0], [1], [0, 0, 1, 1], [], []>} : vector<48x256xf32>, vector<256x128xf32>, vector<48x128xf32> -> vector<48x128xf32>
    %7 = arith.addf %3, %6 : vector<48x128xf32>
    %c0_6 = arith.constant 0 : index
    %c0_7 = arith.constant 0 : index
    %8 = vector.load %arg6[%c0_6, %c0_7] : memref<48x128xf32, #tpu.memory_space<vmem>>, vector<48x128xf32>
    tpu.vector_store %arg6[%c0_6, %c0_7], %7 {strides = array<i32>} : memref<48x128xf32, #tpu.memory_space<vmem>>, vector<48x128xf32>,
    %c0_i32_8 = arith.constant 0 : i32
    %9 = arith.cmpi eq, %arg2, %c0_i32_8 : i32
    %10 = arith.extui %9 : i1 to i32
    %c0_i32_9 = arith.constant 0 : i32
    %11 = arith.cmpi ne, %10, %c0_i32_9 : i32
    scf.if %11 {
      %c0_10 = arith.constant 0 : index
      %c0_11 = arith.constant 0 : index
      %12 = vector.load %arg6[%c0_10, %c0_11] : memref<48x128xf32, #tpu.memory_space<vmem>>, vector<48x128xf32>
      %c0_12 = arith.constant 0 : index
      %c0_13 = arith.constant 0 : index
      %13 = vector.load %arg5[%c0_12, %c0_13] : memref<48x128xf32, #tpu.memory_space<vmem>>, vector<48x128xf32>
      tpu.vector_store %arg5[%c0_12, %c0_13], %12 {strides = array<i32>} : memref<48x128xf32, #tpu.memory_space<vmem>>, vector<48x128xf32>,
    } else {
    }
    return
  }
  func.func @transform_0(%arg0: i32, %arg1: i32, %arg2: i32) -> (i32, i32) {
    %c0_i32 = arith.constant 0 : i32
    return %arg0, %arg2 : i32, i32
  }
  func.func @transform_1(%arg0: i32, %arg1: i32, %arg2: i32) -> (i32, i32) {
    %c0_i32 = arith.constant 0 : i32
    return %arg2, %arg1 : i32, i32
  }
  func.func @transform_2(%arg0: i32, %arg1: i32, %arg2: i32) -> (i32, i32) {
    %c0_i32 = arith.constant 0 : i32
    return %arg0, %arg1 : i32, i32
  }
}

</mosaic_0001>

<llo_original>
// kernel: tpu_custom_call.1
$region0: #{tpu_custom_call.1}
  #allocation0 [shape = 'u32[]', space=smem, size = 0x4, offset = 0x4, fixed_abs, tag = 'smem constant byte address 0x4 - core index']
  #allocation1 [shape = 'u32[144,128]{1,0:T(1,128)}', space=vmem, size = 0x12000, scoped, tag = 'internal scratch']
  %s0 = inlined_call_operand.hbm [shape: f32[48,256], index: 0, kind: input, shape index: {}]
  %s1 = inlined_call_operand.hbm [shape: f32[256,128], index: 1, kind: input, shape index: {}]
  %s2 = inlined_call_operand.hbm [shape: f32[48,128], index: 2, kind: output, shape index: {}]
  %s3 = sld [smem:[#allocation0]]
  $region26: #{tpu_custom_call.1} parent=0
    _
  %s5 = ssub.s32 1, %s3
  %s6 = scalar_select 0, %s5, %s3
  $region1: #{tpu_custom_call.1} parent=0
    #allocation2 [shape = 'u8[49152]{0}', space=vmem, size = 0xc000, scoped, tag = 'input window, operand 0, single buffered']
    #allocation3 [shape = 's32[1]{0}', space=sflag, size = 0x4, scoped, tag = 'scoped memory for tpu_custom_call.1']
    #allocation4 [shape = 's32[1]{0}', space=sflag, size = 0x4, scoped, tag = 'scoped memory for tpu_custom_call.1']
    #allocation5 [shape = 'u8[131072]{0}', space=vmem, size = 0x20000, scoped, tag = 'input window, operand 1, single buffered']
    #allocation6 [shape = 's32[1]{0}', space=sflag, size = 0x4, scoped, tag = 'scoped memory for tpu_custom_call.1']
    #allocation7 [shape = 'u8[24576]{0}', space=vmem, size = 0x6000, scoped, tag = 'output window, operand 0, single buffered']
    %7 = vsyncpa [#allocation3], 0
    %8 = vsyncpa [#allocation6], 0
    %9 = vsyncpa [#allocation4], 0
    // Predicated region
    $region2: #{tpu_custom_call.1} parent=1 // pred_check
      _
    $region3: #{tpu_custom_call.1} parent=1 // pred_check_branch
      %11 = sbr.rel (0) target = $region5
    $region4: #{tpu_custom_call.1} parent=1 // pred_region
      %s13 = ssub.s32 1536, 1536
      %14 = vsyncadd [#allocation3], %s13
      %s15 = sshll.u32 [#allocation2], 4
      %s16 = int_to_ptr.vmem [resolvable:$true] %s15
      %21 = dma.hbm_to_vmem [thread:$0]  %s0, 1536, %s16, [#allocation3], 256, 256, 16
    $region5: #{tpu_custom_call.1} parent=1 // pred_fallthru
      _
    // Predicated region
    $region6: #{tpu_custom_call.1} parent=1 // pred_check
      _
    $region7: #{tpu_custom_call.1} parent=1 // pred_check_branch
      %23 = sbr.rel (0) target = $region9
    $region8: #{tpu_custom_call.1} parent=1 // pred_region
      %s25 = ssub.s32 4096, 4096
      %26 = vsyncadd [#allocation6], %s25
      %s27 = sshll.u32 [#allocation5], 4
      %s28 = int_to_ptr.vmem [resolvable:$true] %s27
      %33 = dma.hbm_to_vmem [thread:$0]  %s1, 4096, %s28, [#allocation6], 128, 128, 8
    $region9: #{tpu_custom_call.1} parent=1 // pred_fallthru
      _
    // Predicated region
    $region10: #{tpu_custom_call.1} parent=1 // pred_check
      _
    $region11: #{tpu_custom_call.1} parent=1 // pred_check_branch
      %35 = sbr.rel (0) target = $region13
    $region12: #{tpu_custom_call.1} parent=1 // pred_region
      %36 = dma.done [#allocation3], 1536
    $region13: #{tpu_custom_call.1} parent=1 // pred_fallthru
      _
    // Predicated region
    $region14: #{tpu_custom_call.1} parent=1 // pred_check
      _
    $region15: #{tpu_custom_call.1} parent=1 // pred_check_branch
      %38 = sbr.rel (0) target = $region17
    $region16: #{tpu_custom_call.1} parent=1 // pred_region
      %39 = dma.done [#allocation6], 4096
    $region17: #{tpu_custom_call.1} parent=1 // pred_fallthru
      _
    %v40 = vld [vmem:[#allocation2] sm:$0xff]
    %v41 = vld [vmem:[#allocation2 + $0x8] sm:$0xff]
    %v42 = vld [vmem:[#allocation2 + $0x10] sm:$0xff]
    %v43 = vld [vmem:[#allocation2 + $0x18] sm:$0xff]
    %v44 = vld [vmem:[#allocation2 + $0x20] sm:$0xff]
    %v45 = vld [vmem:[#allocation2 + $0x28] sm:$0xff]
    %v46 = vld [vmem:[#allocation2 + $0x30] sm:$0xff]
    %v47 = vld [vmem:[#allocation2 + $0x38] sm:$0xff]
    %v48 = vld [vmem:[#allocation2 + $0x40] sm:$0xff]
    %v49 = vld [vmem:[#allocation2 + $0x48] sm:$0xff]
    %v50 = vld [vmem:[#allocation2 + $0x50] sm:$0xff]
    %v51 = vld [vmem:[#allocation2 + $0x58] sm:$0xff]
    %v52 = vld [vmem:[#allocation5] sm:$0xff]
    %v53 = vld [vmem:[#allocation5 + $0x8] sm:$0xff]
    %v54 = vld [vmem:[#allocation5 + $0x10] sm:$0xff]
    %v55 = vld [vmem:[#allocation5 + $0x18] sm:$0xff]
    %v56 = vld [vmem:[#allocation5 + $0x20] sm:$0xff]
    %v57 = vld [vmem:[#allocation5 + $0x28] sm:$0xff]
    %v58 = vld [vmem:[#allocation5 + $0x30] sm:$0xff]
    %v59 = vld [vmem:[#allocation5 + $0x38] sm:$0xff]
    %v60 = vld [vmem:[#allocation5 + $0x40] sm:$0xff]
    %v61 = vld [vmem:[#allocation5 + $0x48] sm:$0xff]
    %v62 = vld [vmem:[#allocation5 + $0x50] sm:$0xff]
    %v63 = vld [vmem:[#allocation5 + $0x58] sm:$0xff]
    %v64 = vld [vmem:[#allocation5 + $0x60] sm:$0xff]
    %v65 = vld [vmem:[#allocation5 + $0x68] sm:$0xff]
    %v66 = vld [vmem:[#allocation5 + $0x70] sm:$0xff]
    %v67 = vld [vmem:[#allocation5 + $0x78] sm:$0xff]
    %v68 = vld [vmem:[#allocation5 + $0x80] sm:$0xff]
    %v69 = vld [vmem:[#allocation5 + $0x88] sm:$0xff]
    %v70 = vld [vmem:[#allocation5 + $0x90] sm:$0xff]
    %v71 = vld [vmem:[#allocation5 + $0x98] sm:$0xff]
    %v72 = vld [vmem:[#allocation5 + $0xa0] sm:$0xff]
    %v73 = vld [vmem:[#allocation5 + $0xa8] sm:$0xff]
    %v74 = vld [vmem:[#allocation5 + $0xb0] sm:$0xff]
    %v75 = vld [vmem:[#allocation5 + $0xb8] sm:$0xff]
    %v76 = vld [vmem:[#allocation5 + $0xc0] sm:$0xff]
    %v77 = vld [vmem:[#allocation5 + $0xc8] sm:$0xff]
    %v78 = vld [vmem:[#allocation5 + $0xd0] sm:$0xff]
    %v79 = vld [vmem:[#allocation5 + $0xd8] sm:$0xff]
    %v80 = vld [vmem:[#allocation5 + $0xe0] sm:$0xff]
    %v81 = vld [vmem:[#allocation5 + $0xe8] sm:$0xff]
    %v82 = vld [vmem:[#allocation5 + $0xf0] sm:$0xff]
    %v83 = vld [vmem:[#allocation5 + $0xf8] sm:$0xff]
    %84 = vmatprep.subr.mxu0 0.0
    %85 = vmatpush1.msra.mxu0 %v67
    %86 = vmatprep.subr.mxu0 0.0
    %87 = vmatpush1.msra.mxu0 %v66
    %88 = vmatprep.subr.mxu0 0.0
    %89 = vmatpush1.msra.mxu0 %v65
    %90 = vmatprep.subr.mxu0 0.0
    %91 = vmatpush1.msra.mxu0 %v64
    %92 = vmatprep.subr.mxu0 0.0
    %93 = vmatpush1.msra.mxu0 %v63
    %94 = vmatprep.subr.mxu0 0.0
    %95 = vmatpush1.msra.mxu0 %v62
    %96 = vmatprep.subr.mxu0 0.0
    %97 = vmatpush1.msra.mxu0 %v61
    %98 = vmatprep.subr.mxu0 0.0
    %99 = vmatpush1.msra.mxu0 %v60
    %100 = vmatprep.subr.mxu0 0.0
    %101 = vmatpush1.msra.mxu0 %v59
    %102 = vmatprep.subr.mxu0 0.0
    %103 = vmatpush1.msra.mxu0 %v58
    %104 = vmatprep.subr.mxu0 0.0
    %105 = vmatpush1.msra.mxu0 %v57
    %106 = vmatprep.subr.mxu0 0.0
    %107 = vmatpush1.msra.mxu0 %v56
    %108 = vmatprep.subr.mxu0 0.0
    %109 = vmatpush1.msra.mxu0 %v55
    %110 = vmatprep.subr.mxu0 0.0
    %111 = vmatpush1.msra.mxu0 %v54
    %112 = vmatprep.subr.mxu0 0.0
    %113 = vmatpush1.msra.mxu0 %v53
    %114 = vmatprep.subr.mxu0 0.0
    %115 = vmatpush1.msra.mxu0 %v52
    %116 = vmatprep.subr.mxu0 0.0
    %117 = vmatpush2.msra.mxu0 %v83
    %118 = vmatprep.subr.mxu0 0.0
    %119 = vmatpush2.msra.mxu0 %v82
    %120 = vmatprep.subr.mxu0 0.0
    %121 = vmatpush2.msra.mxu0 %v81
    %122 = vmatprep.subr.mxu0 0.0
    %123 = vmatpush2.msra.mxu0 %v80
    %124 = vmatprep.subr.mxu0 0.0
    %125 = vmatpush2.msra.mxu0 %v79
    %126 = vmatprep.subr.mxu0 0.0
    %127 = vmatpush2.msra.mxu0 %v78
    %128 = vmatprep.subr.mxu0 0.0
    %129 = vmatpush2.msra.mxu0 %v77
    %130 = vmatprep.subr.mxu0 0.0
    %131 = vmatpush2.msra.mxu0 %v76
    %132 = vmatprep.subr.mxu0 0.0
    %133 = vmatpush2.msra.mxu0 %v75
    %134 = vmatprep.subr.mxu0 0.0
    %135 = vmatpush2.msra.mxu0 %v74
    %136 = vmatprep.subr.mxu0 0.0
    %137 = vmatpush2.msra.mxu0 %v73
    %138 = vmatprep.subr.mxu0 0.0
    %139 = vmatpush2.msra.mxu0 %v72
    %140 = vmatprep.subr.mxu0 0.0
    %141 = vmatpush2.msra.mxu0 %v71
    %142 = vmatprep.subr.mxu0 0.0
    %143 = vmatpush2.msra.mxu0 %v70
    %144 = vmatprep.subr.mxu0 0.0
    %145 = vmatpush2.msra.mxu0 %v69
    %146 = vmatprep.subr.mxu0 0.0
    %147 = vmatpush2.msra.mxu0 %v68
    %148 = vmatprep.mubr.f32.mxu0 %v41
    %149 = vmatmul.mubr.f32.gmra.mxu0 %v40
    %v150 = vpop.f32.mrf.mxu0
    %v151 = vadd.f32 0.0, %v150
    %v152 = vpop.f32.mrf.mxu0
    %153 = vmatprep.mubr.f32.mxu0 %v43
    %154 = vmatmul.mubr.f32.gmra.mxu0 %v42
    %v155 = vpop.f32.mrf.mxu0
    %v156 = vadd.f32 0.0, %v155
    %v157 = vpop.f32.mrf.mxu0
    %158 = vmatprep.mubr.f32.mxu0 %v45
    %159 = vmatmul.mubr.f32.gmra.mxu0 %v44
    %v160 = vpop.f32.mrf.mxu0
    %v161 = vadd.f32 0.0, %v160
    %v162 = vpop.f32.mrf.mxu0
    %163 = vmatprep.mubr.f32.mxu0 %v47
    %164 = vmatmul.mubr.f32.gmra.mxu0 %v46
    %v165 = vpop.f32.mrf.mxu0
    %v166 = vadd.f32 0.0, %v165
    %v167 = vpop.f32.mrf.mxu0
    %168 = vmatprep.mubr.f32.mxu0 %v49
    %169 = vmatmul.mubr.f32.gmra.mxu0 %v48
    %v170 = vpop.f32.mrf.mxu0
    %v171 = vadd.f32 0.0, %v170
    %v172 = vpop.f32.mrf.mxu0
    %173 = vmatprep.mubr.f32.mxu0 %v51
    %174 = vmatmul.mubr.f32.gmra.mxu0 %v50
    %v175 = vpop.f32.mrf.mxu0
    %v176 = vadd.f32 0.0, %v175
    %v177 = vpop.f32.mrf.mxu0
    %178 = vdwg.mxu0
    %179 = vst [vmem:[#allocation7] sm:$0xff] %v151
    %180 = vst [vmem:[#allocation7 + $0x8] sm:$0xff] %v156
    %181 = vst [vmem:[#allocation7 + $0x10] sm:$0xff] %v161
    %182 = vst [vmem:[#allocation7 + $0x18] sm:$0xff] %v166
    %183 = vst [vmem:[#allocation7 + $0x20] sm:$0xff] %v171
    %184 = vst [vmem:[#allocation7 + $0x28] sm:$0xff] %v176
    // Predicated region
    $region18: #{tpu_custom_call.1} parent=1 // pred_check
      _
    $region19: #{tpu_custom_call.1} parent=1 // pred_check_branch
      %186 = sbr.rel (0) target = $region21
    $region20: #{tpu_custom_call.1} parent=1 // pred_region
      %s188 = ssub.s32 768, 768
      %189 = vsyncadd [#allocation4], %s188
      %s190 = sshll.u32 [#allocation7], 4
      %s191 = int_to_ptr.vmem [resolvable:$true] %s190
      %196 = dma.vmem_to_hbm [thread:$0]  %s191, 768, %s2, [#allocation4], 128, 128, 8
    $region21: #{tpu_custom_call.1} parent=1 // pred_fallthru
      _
    // Predicated region
    $region22: #{tpu_custom_call.1} parent=1 // pred_check
      _
    $region23: #{tpu_custom_call.1} parent=1 // pred_check_branch
      %198 = sbr.rel (0) target = $region25
    $region24: #{tpu_custom_call.1} parent=1 // pred_region
      %199 = dma.done [#allocation4], 768
    $region25: #{tpu_custom_call.1} parent=1 // pred_fallthru
      _
    %200 = vsyncpa [#allocation3], 1
    %201 = vsyncpa [#allocation6], 1
    %202 = vsyncpa [#allocation4], 1

// kernel: tpu_custom_call.1
$region0: #{tpu_custom_call.1}
  #allocation0 [shape = 'u32[]', space=smem, size = 0x4, offset = 0x4, fixed_abs, tag = 'smem constant byte address 0x4 - core index']
  #allocation1 [shape = 'u32[144,128]{1,0:T(1,128)}', space=vmem, size = 0x12000, scoped, tag = 'internal scratch']
  #allocation2 [shape = 'f32[48,128]{1,0:T(8,128)}', space=vmem, size = 0x6000, scoped, tag = 'scratch operand']
  %s0 = inlined_call_operand.hbm [shape: f32[48,256], index: 0, kind: input, shape index: {}]
  %s1 = inlined_call_operand.hbm [shape: f32[256,128], index: 1, kind: input, shape index: {}]
  %s2 = inlined_call_operand.hbm [shape: f32[48,128], index: 2, kind: output, shape index: {}]
  %s3 = sld [smem:[#allocation0]]
  $region34: #{tpu_custom_call.1} parent=0
    _
  %s5 = ssub.s32 1, %s3
  %s6 = scalar_select 0, %s5, %s3
  $region1: #{tpu_custom_call.1} parent=0
    #allocation3 [shape = 'u8[49152]{0}', space=vmem, size = 0xc000, scoped, tag = 'input window, operand 0, single buffered']
    #allocation4 [shape = 's32[1]{0}', space=sflag, size = 0x4, scoped, tag = 'scoped memory for tpu_custom_call.1']
    #allocation5 [shape = 's32[1]{0}', space=sflag, size = 0x4, scoped, tag = 'scoped memory for tpu_custom_call.1']
    #allocation6 [shape = 'u8[131072]{0}', space=vmem, size = 0x20000, scoped, tag = 'input window, operand 1, single buffered']
    #allocation7 [shape = 's32[1]{0}', space=sflag, size = 0x4, scoped, tag = 'scoped memory for tpu_custom_call.1']
    #allocation8 [shape = 'u8[24576]{0}', space=vmem, size = 0x6000, scoped, tag = 'output window, operand 0, single buffered']
    %7 = vsyncpa [#allocation4], 0
    %8 = vsyncpa [#allocation7], 0
    %9 = vsyncpa [#allocation5], 0
    // Predicated region
    $region2: #{tpu_custom_call.1} parent=1 // pred_check
      _
    $region3: #{tpu_custom_call.1} parent=1 // pred_check_branch
      %11 = sbr.rel (0) target = $region5
    $region4: #{tpu_custom_call.1} parent=1 // pred_region
      %s13 = ssub.s32 1536, 1536
      %14 = vsyncadd [#allocation4], %s13
      %s15 = sshll.u32 [#allocation3], 4
      %s16 = int_to_ptr.vmem [resolvable:$true] %s15
      %21 = dma.hbm_to_vmem [thread:$0]  %s0, 1536, %s16, [#allocation4], 256, 256, 16
    $region5: #{tpu_custom_call.1} parent=1 // pred_fallthru
      _
    // Predicated region
    $region6: #{tpu_custom_call.1} parent=1 // pred_check
      _
    $region7: #{tpu_custom_call.1} parent=1 // pred_check_branch
      %23 = sbr.rel (0) target = $region9
    $region8: #{tpu_custom_call.1} parent=1 // pred_region
      %s25 = ssub.s32 4096, 4096
      %26 = vsyncadd [#allocation7], %s25
      %s27 = sshll.u32 [#allocation6], 4
      %s28 = int_to_ptr.vmem [resolvable:$true] %s27
      %33 = dma.hbm_to_vmem [thread:$0]  %s1, 4096, %s28, [#allocation7], 128, 128, 8
    $region9: #{tpu_custom_call.1} parent=1 // pred_fallthru
      _
    // Predicated region
    $region10: #{tpu_custom_call.1} parent=1 // pred_check
      _
    $region11: #{tpu_custom_call.1} parent=1 // pred_check_branch
      %35 = sbr.rel (0) target = $region13
    $region12: #{tpu_custom_call.1} parent=1 // pred_region
      %36 = dma.done [#allocation4], 1536
    $region13: #{tpu_custom_call.1} parent=1 // pred_fallthru
      _
    // Predicated region
    $region14: #{tpu_custom_call.1} parent=1 // pred_check
      _
    $region15: #{tpu_custom_call.1} parent=1 // pred_check_branch
      %38 = sbr.rel (0) target = $region17
    $region16: #{tpu_custom_call.1} parent=1 // pred_region
      %39 = dma.done [#allocation7], 4096
    $region17: #{tpu_custom_call.1} parent=1 // pred_fallthru
      _
    %p40 = scmp.eq.s32.totalorder 0, 0
    // Predicated region
    $region18: #{tpu_custom_call.1} parent=1 // pred_check
      %p41 = pneg %p40
    $region19: #{tpu_custom_call.1} parent=1 // pred_check_branch
      %43 = sbr.rel (%p41) target = $region21
    $region20: #{tpu_custom_call.1} parent=1 // pred_region
      %44 = vst [vmem:[#allocation2] sm:$0xff] 0.0
      %45 = vst [vmem:[#allocation2 + $0x8] sm:$0xff] 0.0
      %46 = vst [vmem:[#allocation2 + $0x10] sm:$0xff] 0.0
      %47 = vst [vmem:[#allocation2 + $0x18] sm:$0xff] 0.0
      %48 = vst [vmem:[#allocation2 + $0x20] sm:$0xff] 0.0
      %49 = vst [vmem:[#allocation2 + $0x28] sm:$0xff] 0.0
    $region21: #{tpu_custom_call.1} parent=1 // pred_fallthru
      _
    %v50 = vld [vmem:[#allocation2] sm:$0xff]
    %v51 = vld [vmem:[#allocation2 + $0x8] sm:$0xff]
    %v52 = vld [vmem:[#allocation2 + $0x10] sm:$0xff]
    %v53 = vld [vmem:[#allocation2 + $0x18] sm:$0xff]
    %v54 = vld [vmem:[#allocation2 + $0x20] sm:$0xff]
    %v55 = vld [vmem:[#allocation2 + $0x28] sm:$0xff]
    %v56 = vld [vmem:[#allocation3] sm:$0xff]
    %v57 = vld [vmem:[#allocation3 + $0x8] sm:$0xff]
    %v58 = vld [vmem:[#allocation3 + $0x10] sm:$0xff]
    %v59 = vld [vmem:[#allocation3 + $0x18] sm:$0xff]
    %v60 = vld [vmem:[#allocation3 + $0x20] sm:$0xff]
    %v61 = vld [vmem:[#allocation3 + $0x28] sm:$0xff]
    %v62 = vld [vmem:[#allocation3 + $0x30] sm:$0xff]
    %v63 = vld [vmem:[#allocation3 + $0x38] sm:$0xff]
    %v64 = vld [vmem:[#allocation3 + $0x40] sm:$0xff]
    %v65 = vld [vmem:[#allocation3 + $0x48] sm:$0xff]
    %v66 = vld [vmem:[#allocation3 + $0x50] sm:$0xff]
    %v67 = vld [vmem:[#allocation3 + $0x58] sm:$0xff]
    %v68 = vld [vmem:[#allocation6] sm:$0xff]
    %v69 = vld [vmem:[#allocation6 + $0x8] sm:$0xff]
    %v70 = vld [vmem:[#allocation6 + $0x10] sm:$0xff]
    %v71 = vld [vmem:[#allocation6 + $0x18] sm:$0xff]
    %v72 = vld [vmem:[#allocation6 + $0x20] sm:$0xff]
    %v73 = vld [vmem:[#allocation6 + $0x28] sm:$0xff]
    %v74 = vld [vmem:[#allocation6 + $0x30] sm:$0xff]
    %v75 = vld [vmem:[#allocation6 + $0x38] sm:$0xff]
    %v76 = vld [vmem:[#allocation6 + $0x40] sm:$0xff]
    %v77 = vld [vmem:[#allocation6 + $0x48] sm:$0xff]
    %v78 = vld [vmem:[#allocation6 + $0x50] sm:$0xff]
    %v79 = vld [vmem:[#allocation6 + $0x58] sm:$0xff]
    %v80 = vld [vmem:[#allocation6 + $0x60] sm:$0xff]
    %v81 = vld [vmem:[#allocation6 + $0x68] sm:$0xff]
    %v82 = vld [vmem:[#allocation6 + $0x70] sm:$0xff]
    %v83 = vld [vmem:[#allocation6 + $0x78] sm:$0xff]
    %v84 = vld [vmem:[#allocation6 + $0x80] sm:$0xff]
    %v85 = vld [vmem:[#allocation6 + $0x88] sm:$0xff]
    %v86 = vld [vmem:[#allocation6 + $0x90] sm:$0xff]
    %v87 = vld [vmem:[#allocation6 + $0x98] sm:$0xff]
    %v88 = vld [vmem:[#allocation6 + $0xa0] sm:$0xff]
    %v89 = vld [vmem:[#allocation6 + $0xa8] sm:$0xff]
    %v90 = vld [vmem:[#allocation6 + $0xb0] sm:$0xff]
    %v91 = vld [vmem:[#allocation6 + $0xb8] sm:$0xff]
    %v92 = vld [vmem:[#allocation6 + $0xc0] sm:$0xff]
    %v93 = vld [vmem:[#allocation6 + $0xc8] sm:$0xff]
    %v94 = vld [vmem:[#allocation6 + $0xd0] sm:$0xff]
    %v95 = vld [vmem:[#allocation6 + $0xd8] sm:$0xff]
    %v96 = vld [vmem:[#allocation6 + $0xe0] sm:$0xff]
    %v97 = vld [vmem:[#allocation6 + $0xe8] sm:$0xff]
    %v98 = vld [vmem:[#allocation6 + $0xf0] sm:$0xff]
    %v99 = vld [vmem:[#allocation6 + $0xf8] sm:$0xff]
    %100 = vmatprep.subr.mxu0 0.0
    %101 = vmatpush1.msra.mxu0 %v83
    %102 = vmatprep.subr.mxu0 0.0
    %103 = vmatpush1.msra.mxu0 %v82
    %104 = vmatprep.subr.mxu0 0.0
    %105 = vmatpush1.msra.mxu0 %v81
    %106 = vmatprep.subr.mxu0 0.0
    %107 = vmatpush1.msra.mxu0 %v80
    %108 = vmatprep.subr.mxu0 0.0
    %109 = vmatpush1.msra.mxu0 %v79
    %110 = vmatprep.subr.mxu0 0.0
    %111 = vmatpush1.msra.mxu0 %v78
    %112 = vmatprep.subr.mxu0 0.0
    %113 = vmatpush1.msra.mxu0 %v77
    %114 = vmatprep.subr.mxu0 0.0
    %115 = vmatpush1.msra.mxu0 %v76
    %116 = vmatprep.subr.mxu0 0.0
    %117 = vmatpush1.msra.mxu0 %v75
    %118 = vmatprep.subr.mxu0 0.0
    %119 = vmatpush1.msra.mxu0 %v74
    %120 = vmatprep.subr.mxu0 0.0
    %121 = vmatpush1.msra.mxu0 %v73
    %122 = vmatprep.subr.mxu0 0.0
    %123 = vmatpush1.msra.mxu0 %v72
    %124 = vmatprep.subr.mxu0 0.0
    %125 = vmatpush1.msra.mxu0 %v71
    %126 = vmatprep.subr.mxu0 0.0
    %127 = vmatpush1.msra.mxu0 %v70
    %128 = vmatprep.subr.mxu0 0.0
    %129 = vmatpush1.msra.mxu0 %v69
    %130 = vmatprep.subr.mxu0 0.0
    %131 = vmatpush1.msra.mxu0 %v68
    %132 = vmatprep.subr.mxu0 0.0
    %133 = vmatpush2.msra.mxu0 %v99
    %134 = vmatprep.subr.mxu0 0.0
    %135 = vmatpush2.msra.mxu0 %v98
    %136 = vmatprep.subr.mxu0 0.0
    %137 = vmatpush2.msra.mxu0 %v97
    %138 = vmatprep.subr.mxu0 0.0
    %139 = vmatpush2.msra.mxu0 %v96
    %140 = vmatprep.subr.mxu0 0.0
    %141 = vmatpush2.msra.mxu0 %v95
    %142 = vmatprep.subr.mxu0 0.0
    %143 = vmatpush2.msra.mxu0 %v94
    %144 = vmatprep.subr.mxu0 0.0
    %145 = vmatpush2.msra.mxu0 %v93
    %146 = vmatprep.subr.mxu0 0.0
    %147 = vmatpush2.msra.mxu0 %v92
    %148 = vmatprep.subr.mxu0 0.0
    %149 = vmatpush2.msra.mxu0 %v91
    %150 = vmatprep.subr.mxu0 0.0
    %151 = vmatpush2.msra.mxu0 %v90
    %152 = vmatprep.subr.mxu0 0.0
    %153 = vmatpush2.msra.mxu0 %v89
    %154 = vmatprep.subr.mxu0 0.0
    %155 = vmatpush2.msra.mxu0 %v88
    %156 = vmatprep.subr.mxu0 0.0
    %157 = vmatpush2.msra.mxu0 %v87
    %158 = vmatprep.subr.mxu0 0.0
    %159 = vmatpush2.msra.mxu0 %v86
    %160 = vmatprep.subr.mxu0 0.0
    %161 = vmatpush2.msra.mxu0 %v85
    %162 = vmatprep.subr.mxu0 0.0
    %163 = vmatpush2.msra.mxu0 %v84
    %164 = vmatprep.mubr.f32.mxu0 %v57
    %165 = vmatmul.mubr.f32.gmra.mxu0 %v56
    %v166 = vpop.f32.mrf.mxu0
    %v167 = vadd.f32 0.0, %v166
    %v168 = vpop.f32.mrf.mxu0
    %169 = vmatprep.mubr.f32.mxu0 %v59
    %170 = vmatmul.mubr.f32.gmra.mxu0 %v58
    %v171 = vpop.f32.mrf.mxu0
    %v172 = vadd.f32 0.0, %v171
    %v173 = vpop.f32.mrf.mxu0
    %174 = vmatprep.mubr.f32.mxu0 %v61
    %175 = vmatmul.mubr.f32.gmra.mxu0 %v60
    %v176 = vpop.f32.mrf.mxu0
    %v177 = vadd.f32 0.0, %v176
    %v178 = vpop.f32.mrf.mxu0
    %179 = vmatprep.mubr.f32.mxu0 %v63
    %180 = vmatmul.mubr.f32.gmra.mxu0 %v62
    %v181 = vpop.f32.mrf.mxu0
    %v182 = vadd.f32 0.0, %v181
    %v183 = vpop.f32.mrf.mxu0
    %184 = vmatprep.mubr.f32.mxu0 %v65
    %185 = vmatmul.mubr.f32.gmra.mxu0 %v64
    %v186 = vpop.f32.mrf.mxu0
    %v187 = vadd.f32 0.0, %v186
    %v188 = vpop.f32.mrf.mxu0
    %189 = vmatprep.mubr.f32.mxu0 %v67
    %190 = vmatmul.mubr.f32.gmra.mxu0 %v66
    %v191 = vpop.f32.mrf.mxu0
    %v192 = vadd.f32 0.0, %v191
    %v193 = vpop.f32.mrf.mxu0
    %194 = vdwg.mxu0
    %v195 = vadd.f32 %v50, %v167
    %v196 = vadd.f32 %v51, %v172
    %v197 = vadd.f32 %v52, %v177
    %v198 = vadd.f32 %v53, %v182
    %v199 = vadd.f32 %v54, %v187
    %v200 = vadd.f32 %v55, %v192
    %201 = vst [vmem:[#allocation2] sm:$0xff] %v195
    %202 = vst [vmem:[#allocation2 + $0x8] sm:$0xff] %v196
    %203 = vst [vmem:[#allocation2 + $0x10] sm:$0xff] %v197
    %204 = vst [vmem:[#allocation2 + $0x18] sm:$0xff] %v198
    %205 = vst [vmem:[#allocation2 + $0x20] sm:$0xff] %v199
    %206 = vst [vmem:[#allocation2 + $0x28] sm:$0xff] %v200
    // Predicated region
    $region22: #{tpu_custom_call.1} parent=1 // pred_check
      %p207 = pneg %p40
    $region23: #{tpu_custom_call.1} parent=1 // pred_check_branch
      %209 = sbr.rel (%p207) target = $region25
    $region24: #{tpu_custom_call.1} parent=1 // pred_region
      %v210 = vld [vmem:[#allocation2] sm:$0xff]
      %v211 = vld [vmem:[#allocation2 + $0x8] sm:$0xff]
      %v212 = vld [vmem:[#allocation2 + $0x10] sm:$0xff]
      %v213 = vld [vmem:[#allocation2 + $0x18] sm:$0xff]
      %v214 = vld [vmem:[#allocation2 + $0x20] sm:$0xff]
      %v215 = vld [vmem:[#allocation2 + $0x28] sm:$0xff]
      %216 = vst [vmem:[#allocation8] sm:$0xff] %v210
      %217 = vst [vmem:[#allocation8 + $0x8] sm:$0xff] %v211
      %218 = vst [vmem:[#allocation8 + $0x10] sm:$0xff] %v212
      %219 = vst [vmem:[#allocation8 + $0x18] sm:$0xff] %v213
      %220 = vst [vmem:[#allocation8 + $0x20] sm:$0xff] %v214
      %221 = vst [vmem:[#allocation8 + $0x28] sm:$0xff] %v215
    $region25: #{tpu_custom_call.1} parent=1 // pred_fallthru
      _
    // Predicated region
    $region26: #{tpu_custom_call.1} parent=1 // pred_check
      _
    $region27: #{tpu_custom_call.1} parent=1 // pred_check_branch
      %223 = sbr.rel (0) target = $region29
    $region28: #{tpu_custom_call.1} parent=1 // pred_region
      %s225 = ssub.s32 768, 768
      %226 = vsyncadd [#allocation5], %s225
      %s227 = sshll.u32 [#allocation8], 4
      %s228 = int_to_ptr.vmem [resolvable:$true] %s227
      %233 = dma.vmem_to_hbm [thread:$0]  %s228, 768, %s2, [#allocation5], 128, 128, 8
    $region29: #{tpu_custom_call.1} parent=1 // pred_fallthru
      _
    // Predicated region
    $region30: #{tpu_custom_call.1} parent=1 // pred_check
      _
    $region31: #{tpu_custom_call.1} parent=1 // pred_check_branch
      %235 = sbr.rel (0) target = $region33
    $region32: #{tpu_custom_call.1} parent=1 // pred_region
      %236 = dma.done [#allocation5], 768
    $region33: #{tpu_custom_call.1} parent=1 // pred_fallthru
      _
    %237 = vsyncpa [#allocation4], 1
    %238 = vsyncpa [#allocation7], 1
    %239 = vsyncpa [#allocation5], 1

</llo_original>
